<compile_context>
chip_gen: v6e
topology: v6e:2x2x1
jax: 0.10.0
libtpu: 0.0.40
codegen_flags: <defaults>
</compile_context>

<pallas_src>
import jax
import jax.numpy as jnp
from jax.experimental import pallas as pl
from jax.experimental.pallas import tpu as pltpu


# --------------------------------- kernel ---------------------------------
def gnn_cell_kernel(
    a_in_ref, a_out_ref, h_ref,
    wei_ref, bei_ref,                  # linear_edge_in  (H,H) pre-transposed, (1,H)
    weo_ref, beo_ref,                  # linear_edge_out (H,H) pre-transposed, (1,H)
    wg_in_ref, wg_out_ref, wg_h_ref,   # fused gate weights, (H,4H) each
    bg_ref,                            # fused gate bias, (1,4H)
    out_ref,
    h_scratch,                         # (Bt*N, H) f32 running hidden across steps
):
    f32 = jnp.float32
    bt, n, _ = a_in_ref.shape
    hsz = h_ref.shape[1]
    s = pl.program_id(1)

    # Step 0 of each batch tile: seed the running hidden from HBM input.
    @pl.when(s == 0)
    def _():
        h_scratch[...] = h_ref[...].astype(f32)

    h2 = h_scratch[...]                # (Bt*N, H)

    # Edge linear layers (weights already (in, out) -> plain MXU matmuls).
    edge_in = jnp.dot(h2, wei_ref[...], preferred_element_type=f32) + bei_ref[...]
    edge_out = jnp.dot(h2, weo_ref[...], preferred_element_type=f32) + beo_ref[...]

    # Per-graph message passing: batched MXU matmuls over the batch tile.
    msg_in = jnp.einsum(
        'bij,bjd->bid', a_in_ref[...], edge_in.reshape(bt, n, hsz),
        preferred_element_type=f32).reshape(bt * n, hsz)
    msg_out = jnp.einsum(
        'bij,bjd->bid', a_out_ref[...], edge_out.reshape(bt, n, hsz),
        preferred_element_type=f32).reshape(bt * n, hsz)

    # Fused gate pre-activations, columns = [reset(sum), update(sum), i_n, h_n].
    g = (jnp.dot(msg_in, wg_in_ref[...], preferred_element_type=f32)
         + jnp.dot(msg_out, wg_out_ref[...], preferred_element_type=f32)
         + jnp.dot(h2, wg_h_ref[...], preferred_element_type=f32)
         + bg_ref[...])

    resetgate = jax.nn.sigmoid(g[:, :hsz])
    inputgate = jax.nn.sigmoid(g[:, hsz:2 * hsz])
    newgate = jnp.tanh(g[:, 2 * hsz:3 * hsz] + resetgate * g[:, 3 * hsz:])
    hy = newgate + inputgate * (h2 - newgate)

    h_scratch[...] = hy                # carry to the next propagation step

    @pl.when(s == pl.num_programs(1) - 1)
    def _():
        out_ref[...] = hy.astype(out_ref.dtype)


# --------------------------- wrapper-side algebra ---------------------------
def prepare_params(p):
    """Fuse w1->w_ih, w2->w_hh, fold b_iah/b_oah, pre-sum reset/update gate columns,
    and pre-transpose everything to (in, out)."""
    H = p["w_edge_in"].shape[0]
    G = 3 * H
    w1, w2 = p["w_in1"], p["w_in2"]
    w_ih, w_hh = p["w_ih"], p["w_hh"]
    b_iah = p["b_iah"].reshape(1, H)
    b_oah = p["b_oah"].reshape(1, H)

    # Per-path (H, 3H) gate weights for the gi / gh branches.
    wgi_in = (w_ih[:, :H] + w1[:, :H]).T
    wgi_out = (w_ih[:, H:2 * H] + w1[:, H:2 * H]).T
    wgi_h = w1[:, 2 * H:].T
    wgh_in = w2[:, :H].T
    wgh_out = w2[:, H:2 * H].T
    wgh_h = (w_hh + w2[:, 2 * H:]).T

    bgi = (p["b_ih"].reshape(1, G) + p["b_in1"].reshape(1, G)
           + b_iah @ wgi_in + b_oah @ wgi_out)
    bgh = (p["b_hh"].reshape(1, G) + p["b_in2"].reshape(1, G)
           + b_iah @ wgh_in + b_oah @ wgh_out)

    def fuse(wi, wh):
        # [reset = i_r+h_r, update = i_i+h_i, i_n, h_n] -> width 4H
        return jnp.concatenate(
            [wi[:, :H] + wh[:, :H], wi[:, H:2 * H] + wh[:, H:2 * H],
             wi[:, 2 * H:], wh[:, 2 * H:]], axis=1)

    return {
        "wei": p["w_edge_in"].T, "bei": p["b_edge_in"].reshape(1, H),
        "weo": p["w_edge_out"].T, "beo": p["b_edge_out"].reshape(1, H),
        "wg_in": fuse(wgi_in, wgh_in),
        "wg_out": fuse(wgi_out, wgh_out),
        "wg_h": fuse(wgi_h, wgh_h),
        "bg": fuse(bgi, bgh),
    }


def pick_batch_tile(B, N, target_rows=512):
    """Largest divisor of B with tile*N <= target rows and sublane-aligned rows."""
    best = None
    for cand in range(1, B + 1):
        if B % cand == 0 and cand * N <= max(target_rows, N) and (cand * N) % 8 == 0:
            best = cand
    return best if best is not None else B   # full-array block is always legal


def gnn_forward(A, hidden, params, step=1):
    B, N, H = hidden.shape
    G4 = 4 * H
    prepped = prepare_params(params)          # hoisted: done once, not per step
    a_in = A[:, :, :N]                        # split adjacency halves once, wrapper-side
    a_out = A[:, :, N:2 * N]
    bt = pick_batch_tile(B, N)
    h_flat = hidden.reshape(B * N, H)

    def const_spec(shape):
        nd = len(shape)
        return pl.BlockSpec(shape, lambda b, s: (0,) * nd)

    in_specs = [
        pl.BlockSpec((bt, N, N), lambda b, s: (b, 0, 0)),      # A_in
        pl.BlockSpec((bt, N, N), lambda b, s: (b, 0, 0)),      # A_out
        pl.BlockSpec((bt * N, H), lambda b, s: (b, 0)),        # hidden (flattened)
        const_spec((H, H)), const_spec((1, H)),                # edge_in
        const_spec((H, H)), const_spec((1, H)),                # edge_out
        const_spec((H, G4)), const_spec((H, G4)), const_spec((H, G4)),  # gate weights
        const_spec((1, G4)),                                   # gate bias
    ]

    out = pl.pallas_call(
        gnn_cell_kernel,
        out_shape=jax.ShapeDtypeStruct((B * N, H), hidden.dtype),
        grid_spec=pltpu.PrefetchScalarGridSpec(
            num_scalar_prefetch=0,
            grid=(B // bt, step),              # batch tiles outer, prop steps inner
            in_specs=in_specs,
            out_specs=pl.BlockSpec((bt * N, H), lambda b, s: (b, 0)),
            scratch_shapes=[pltpu.VMEM((bt * N, H), jnp.float32)],
        ),
        compiler_params=pltpu.CompilerParams(
            dimension_semantics=("parallel", "arbitrary")),
    )(
        a_in, a_out, h_flat,
        prepped["wei"], prepped["bei"], prepped["weo"], prepped["beo"],
        prepped["wg_in"], prepped["wg_out"], prepped["wg_h"], prepped["bg"],
    )
    return out.reshape(B, N, H)


# ------------------ pure-JAX reference (for correctness check) ------------------
def gnn_cell_ref(A, hidden, p):
    N = A.shape[1]
    lin = lambda x, w, b: x @ w.T + b[0]
    input_in = jnp.matmul(A[:, :, :N], lin(hidden, p["w_edge_in"], p["b_edge_in"])) + p["b_iah"][0]
    input_out = jnp.matmul(A[:, :, N:2 * N], lin(hidden, p["w_edge_out"], p["b_edge_out"])) + p["b_oah"][0]
    inputs = jnp.concatenate([input_in, input_out], axis=2)
    test = jnp.concatenate([inputs, hidden], axis=2)
    test1 = lin(test, p["w_in1"], p["b_in1"])
    test2 = lin(test, p["w_in2"], p["b_in2"])
    gi = lin(inputs, p["w_ih"], p["b_ih"]) + test1
    gh = lin(hidden, p["w_hh"], p["b_hh"]) + test2
    i_r, i_i, i_n = jnp.split(gi, 3, axis=2)
    h_r, h_i, h_n = jnp.split(gh, 3, axis=2)
    resetgate = jax.nn.sigmoid(i_r + h_r)
    inputgate = jax.nn.sigmoid(i_i + h_i)
    newgate = jnp.tanh(i_n + resetgate * h_n)
    return newgate + inputgate * (hidden - newgate)


def init_params(key, hidden_size):
    H = hidden_size
    G = 3 * H
    stdv = 1.0 / jnp.sqrt(jnp.float32(H))
    ks = jax.random.split(key, 16)
    u = lambda k, shape: jax.random.uniform(k, shape, jnp.float32, -stdv, stdv)
    # NOTE: linear_edge_f is declared in the PyTorch __init__ but unused in forward; omitted.
    return {
        "w_edge_in": u(ks[0], (H, H)),   "b_edge_in": u(ks[1], (1, H)),
        "w_edge_out": u(ks[2], (H, H)),  "b_edge_out": u(ks[3], (1, H)),
        "b_iah": u(ks[4], (1, H)),       "b_oah": u(ks[5], (1, H)),
        "w_in1": u(ks[6], (G, G)),       "b_in1": u(ks[7], (1, G)),
        "w_in2": u(ks[8], (G, G)),       "b_in2": u(ks[9], (1, G)),
        "w_ih": u(ks[10], (G, 2 * H)),   "b_ih": u(ks[11], (1, G)),
        "w_hh": u(ks[12], (G, H)),       "b_hh": u(ks[13], (1, G)),
    }


if __name__ == "__main__":
    B, N, H = 2, 8, 32

    key = jax.random.PRNGKey(0)
    k_a, k_h, k_p = jax.random.split(key, 3)

    # normalized adjacency-like input (non-negative, row-normalized halves)
    A_raw = jax.random.uniform(k_a, (B, N, 2 * N), jnp.float32)
    A = A_raw / jnp.sum(A_raw, axis=2, keepdims=True)
    hidden = jax.random.normal(k_h, (B, N, H), jnp.float32)
    params = init_params(k_p, H)

    # Check both the module default (step=1) and the in-kernel multi-step path.
    for step in (1, 3):
        out = jax.block_until_ready(gnn_forward(A, hidden, params, step=step))
        ref = hidden
        for _ in range(step):
            ref = gnn_cell_ref(A, ref, params)
        assert out.shape == ref.shape
        assert jnp.allclose(out, ref, atol=1e-4, rtol=1e-4), f"mismatch vs reference (step={step})"

    print("KERNEL_OK")
</pallas_src>

<mosaic_0001>
module attributes {stable_mosaic.version = 11 : i64} {
  func.func @gnn_cell_kernel(%arg0: i32, %arg1: i32, %arg2: memref<2x8x8xf32, #tpu.memory_space<vmem>>, %arg3: memref<2x8x8xf32, #tpu.memory_space<vmem>>, %arg4: memref<16x32xf32, #tpu.memory_space<vmem>>, %arg5: memref<32x32xf32, #tpu.memory_space<vmem>>, %arg6: memref<1x32xf32, #tpu.memory_space<vmem>>, %arg7: memref<32x32xf32, #tpu.memory_space<vmem>>, %arg8: memref<1x32xf32, #tpu.memory_space<vmem>>, %arg9: memref<32x128xf32, #tpu.memory_space<vmem>>, %arg10: memref<32x128xf32, #tpu.memory_space<vmem>>, %arg11: memref<32x128xf32, #tpu.memory_space<vmem>>, %arg12: memref<1x128xf32, #tpu.memory_space<vmem>>, %arg13: memref<16x32xf32, #tpu.memory_space<vmem>>, %arg14: memref<16x32xf32, #tpu.memory_space<vmem>>) attributes {dimension_semantics = [#tpu.dimension_semantics<parallel>, #tpu.dimension_semantics<arbitrary>], iteration_bounds = array<i64: 1, 1>, scalar_prefetch = 0 : i64, scratch_operands = 1 : i64, tpu.core_type = #tpu.core_type<tc>, window_params = [{transform_indices = @transform_0, window_bounds = array<i64: 2, 8, 8>}, {transform_indices = @transform_1, window_bounds = array<i64: 2, 8, 8>}, {transform_indices = @transform_2, window_bounds = array<i64: 16, 32>}, {pipeline_mode = #tpu.pipeline_mode<synchronous>, transform_indices = @transform_3, window_bounds = array<i64: 32, 32>}, {pipeline_mode = #tpu.pipeline_mode<synchronous>, transform_indices = @transform_4, window_bounds = array<i64: 1, 32>}, {pipeline_mode = #tpu.pipeline_mode<synchronous>, transform_indices = @transform_5, window_bounds = array<i64: 32, 32>}, {pipeline_mode = #tpu.pipeline_mode<synchronous>, transform_indices = @transform_6, window_bounds = array<i64: 1, 32>}, {pipeline_mode = #tpu.pipeline_mode<synchronous>, transform_indices = @transform_7, window_bounds = array<i64: 32, 128>}, {pipeline_mode = #tpu.pipeline_mode<synchronous>, transform_indices = @transform_8, window_bounds = array<i64: 32, 128>}, {pipeline_mode = #tpu.pipeline_mode<synchronous>, transform_indices = @transform_9, window_bounds = array<i64: 32, 128>}, {pipeline_mode = #tpu.pipeline_mode<synchronous>, transform_indices = @transform_10, window_bounds = array<i64: 1, 128>}, {transform_indices = @transform_11, window_bounds = array<i64: 16, 32>}]} {
    %c0_i32 = arith.constant 0 : i32
    %0 = arith.cmpi eq, %arg1, %c0_i32 : i32
    %1 = arith.extui %0 : i1 to i32
    %c0_i32_0 = arith.constant 0 : i32
    %2 = arith.cmpi ne, %1, %c0_i32_0 : i32
    scf.if %2 {
      %c0_36 = arith.constant 0 : index
      %c0_37 = arith.constant 0 : index
      %57 = vector.load %arg4[%c0_36, %c0_37] : memref<16x32xf32, #tpu.memory_space<vmem>>, vector<16x32xf32>
      %c0_38 = arith.constant 0 : index
      %c0_39 = arith.constant 0 : index
      %58 = vector.load %arg14[%c0_38, %c0_39] : memref<16x32xf32, #tpu.memory_space<vmem>>, vector<16x32xf32>
      tpu.vector_store %arg14[%c0_38, %c0_39], %57 {strides = array<i32>} : memref<16x32xf32, #tpu.memory_space<vmem>>, vector<16x32xf32>,
    } else {
    }
    %c0 = arith.constant 0 : index
    %c0_1 = arith.constant 0 : index
    %3 = vector.load %arg14[%c0, %c0_1] : memref<16x32xf32, #tpu.memory_space<vmem>>, vector<16x32xf32>
    %c0_2 = arith.constant 0 : index
    %c0_3 = arith.constant 0 : index
    %4 = vector.load %arg5[%c0_2, %c0_3] : memref<32x32xf32, #tpu.memory_space<vmem>>, vector<32x32xf32>
    %cst = arith.constant dense<0.000000e+00> : vector<16x32xf32>
    %5 = tpu.matmul %3, %4, %cst {dimension_numbers = #tpu.dot_dimension_numbers<[1], [0], [0], [1], [0, 0, 1, 1], [], []>} : vector<16x32xf32>, vector<32x32xf32>, vector<16x32xf32> -> vector<16x32xf32>
    %c0_4 = arith.constant 0 : index
    %c0_5 = arith.constant 0 : index
    %6 = vector.load %arg6[%c0_4, %c0_5] : memref<1x32xf32, #tpu.memory_space<vmem>>, vector<1x32xf32>
    %7 = vector.broadcast %6 : vector<1x32xf32> to vector<16x32xf32>
    %8 = arith.addf %5, %7 : vector<16x32xf32>
    %c0_6 = arith.constant 0 : index
    %c0_7 = arith.constant 0 : index
    %9 = vector.load %arg7[%c0_6, %c0_7] : memref<32x32xf32, #tpu.memory_space<vmem>>, vector<32x32xf32>
    %cst_8 = arith.constant dense<0.000000e+00> : vector<16x32xf32>
    %10 = tpu.matmul %3, %9, %cst_8 {dimension_numbers = #tpu.dot_dimension_numbers<[1], [0], [0], [1], [0, 0, 1, 1], [], []>} : vector<16x32xf32>, vector<32x32xf32>, vector<16x32xf32> -> vector<16x32xf32>
    %c0_9 = arith.constant 0 : index
    %c0_10 = arith.constant 0 : index
    %11 = vector.load %arg8[%c0_9, %c0_10] : memref<1x32xf32, #tpu.memory_space<vmem>>, vector<1x32xf32>
    %12 = vector.broadcast %11 : vector<1x32xf32> to vector<16x32xf32>
    %13 = arith.addf %10, %12 : vector<16x32xf32>
    %c0_11 = arith.constant 0 : index
    %c0_12 = arith.constant 0 : index
    %c0_13 = arith.constant 0 : index
    %14 = vector.load %arg2[%c0_11, %c0_12, %c0_13] : memref<2x8x8xf32, #tpu.memory_space<vmem>>, vector<2x8x8xf32>
    %15 = vector.shape_cast %8 : vector<16x32xf32> to vector<2x8x32xf32>
    "tpu.trace_start"() <{level = 10 : i32, message = "bij,bjd->bid"}> : () -> ()
    %cst_14 = arith.constant dense<0.000000e+00> : vector<2x8x32xf32>
    %16 = tpu.matmul %14, %15, %cst_14 {dimension_numbers = #tpu.dot_dimension_numbers<[2], [1], [1], [2], [0, 0, 0, 1, 1, 2], [0], [0]>} : vector<2x8x8xf32>, vector<2x8x32xf32>, vector<2x8x32xf32> -> vector<2x8x32xf32>
    "tpu.trace_stop"() : () -> ()
    %17 = vector.shape_cast %16 : vector<2x8x32xf32> to vector<16x32xf32>
    %c0_15 = arith.constant 0 : index
    %c0_16 = arith.constant 0 : index
    %c0_17 = arith.constant 0 : index
    %18 = vector.load %arg3[%c0_15, %c0_16, %c0_17] : memref<2x8x8xf32, #tpu.memory_space<vmem>>, vector<2x8x8xf32>
    %19 = vector.shape_cast %13 : vector<16x32xf32> to vector<2x8x32xf32>
    "tpu.trace_start"() <{level = 10 : i32, message = "bij,bjd->bid"}> : () -> ()
    %cst_18 = arith.constant dense<0.000000e+00> : vector<2x8x32xf32>
    %20 = tpu.matmul %18, %19, %cst_18 {dimension_numbers = #tpu.dot_dimension_numbers<[2], [1], [1], [2], [0, 0, 0, 1, 1, 2], [0], [0]>} : vector<2x8x8xf32>, vector<2x8x32xf32>, vector<2x8x32xf32> -> vector<2x8x32xf32>
    "tpu.trace_stop"() : () -> ()
    %21 = vector.shape_cast %20 : vector<2x8x32xf32> to vector<16x32xf32>
    %c0_19 = arith.constant 0 : index
    %c0_20 = arith.constant 0 : index
    %22 = vector.load %arg9[%c0_19, %c0_20] : memref<32x128xf32, #tpu.memory_space<vmem>>, vector<32x128xf32>
    %cst_21 = arith.constant dense<0.000000e+00> : vector<16x128xf32>
    %23 = tpu.matmul %17, %22, %cst_21 {dimension_numbers = #tpu.dot_dimension_numbers<[1], [0], [0], [1], [0, 0, 1, 1], [], []>} : vector<16x32xf32>, vector<32x128xf32>, vector<16x128xf32> -> vector<16x128xf32>
    %c0_22 = arith.constant 0 : index
    %c0_23 = arith.constant 0 : index
    %24 = vector.load %arg10[%c0_22, %c0_23] : memref<32x128xf32, #tpu.memory_space<vmem>>, vector<32x128xf32>
    %cst_24 = arith.constant dense<0.000000e+00> : vector<16x128xf32>
    %25 = tpu.matmul %21, %24, %cst_24 {dimension_numbers = #tpu.dot_dimension_numbers<[1], [0], [0], [1], [0, 0, 1, 1], [], []>} : vector<16x32xf32>, vector<32x128xf32>, vector<16x128xf32> -> vector<16x128xf32>
    %26 = arith.addf %23, %25 : vector<16x128xf32>
    %c0_25 = arith.constant 0 : index
    %c0_26 = arith.constant 0 : index
    %27 = vector.load %arg11[%c0_25, %c0_26] : memref<32x128xf32, #tpu.memory_space<vmem>>, vector<32x128xf32>
    %cst_27 = arith.constant dense<0.000000e+00> : vector<16x128xf32>
    %28 = tpu.matmul %3, %27, %cst_27 {dimension_numbers = #tpu.dot_dimension_numbers<[1], [0], [0], [1], [0, 0, 1, 1], [], []>} : vector<16x32xf32>, vector<32x128xf32>, vector<16x128xf32> -> vector<16x128xf32>
    %29 = arith.addf %26, %28 : vector<16x128xf32>
    %c0_28 = arith.constant 0 : index
    %c0_29 = arith.constant 0 : index
    %30 = vector.load %arg12[%c0_28, %c0_29] : memref<1x128xf32, #tpu.memory_space<vmem>>, vector<1x128xf32>
    %31 = vector.broadcast %30 : vector<1x128xf32> to vector<16x128xf32>
    %32 = arith.addf %29, %31 : vector<16x128xf32>
    %33 = vector.extract_strided_slice %32 {offsets = [0, 0], sizes = [16, 32], strides = [1, 1]} : vector<16x128xf32> to vector<16x32xf32>
    %34 = arith.negf %33 : vector<16x32xf32>
    %35 = math.exp %34 : vector<16x32xf32>
    %cst_30 = arith.constant 1.000000e+00 : f32
    %36 = vector.broadcast %cst_30 : f32 to vector<16x32xf32>
    %37 = arith.addf %36, %35 : vector<16x32xf32>
    %38 = arith.divf %36, %37 : vector<16x32xf32>
    %39 = vector.extract_strided_slice %32 {offsets = [0, 32], sizes = [16, 32], strides = [1, 1]} : vector<16x128xf32> to vector<16x32xf32>
    %40 = arith.negf %39 : vector<16x32xf32>
    %41 = math.exp %40 : vector<16x32xf32>
    %cst_31 = arith.constant 1.000000e+00 : f32
    %42 = vector.broadcast %cst_31 : f32 to vector<16x32xf32>
    %43 = arith.addf %42, %41 : vector<16x32xf32>
    %44 = arith.divf %42, %43 : vector<16x32xf32>
    %45 = vector.extract_strided_slice %32 {offsets = [0, 64], sizes = [16, 32], strides = [1, 1]} : vector<16x128xf32> to vector<16x32xf32>
    %46 = vector.extract_strided_slice %32 {offsets = [0, 96], sizes = [16, 32], strides = [1, 1]} : vector<16x128xf32> to vector<16x32xf32>
    %47 = arith.mulf %38, %46 : vector<16x32xf32>
    %48 = arith.addf %45, %47 : vector<16x32xf32>
    %49 = math.tanh %48 : vector<16x32xf32>
    %50 = arith.subf %3, %49 : vector<16x32xf32>
    %51 = arith.mulf %44, %50 : vector<16x32xf32>
    %52 = arith.addf %49, %51 : vector<16x32xf32>
    %c0_32 = arith.constant 0 : index
    %c0_33 = arith.constant 0 : index
    %53 = vector.load %arg14[%c0_32, %c0_33] : memref<16x32xf32, #tpu.memory_space<vmem>>, vector<16x32xf32>
    tpu.vector_store %arg14[%c0_32, %c0_33], %52 {strides = array<i32>} : memref<16x32xf32, #tpu.memory_space<vmem>>, vector<16x32xf32>,
    %c0_i32_34 = arith.constant 0 : i32
    %54 = arith.cmpi eq, %arg1, %c0_i32_34 : i32
    %55 = arith.extui %54 : i1 to i32
    %c0_i32_35 = arith.constant 0 : i32
    %56 = arith.cmpi ne, %55, %c0_i32_35 : i32
    scf.if %56 {
      %c0_36 = arith.constant 0 : index
      %c0_37 = arith.constant 0 : index
      %57 = vector.load %arg13[%c0_36, %c0_37] : memref<16x32xf32, #tpu.memory_space<vmem>>, vector<16x32xf32>
      tpu.vector_store %arg13[%c0_36, %c0_37], %52 {strides = array<i32>} : memref<16x32xf32, #tpu.memory_space<vmem>>, vector<16x32xf32>,
    } else {
    }
    return
  }
  func.func @transform_0(%arg0: i32, %arg1: i32) -> (i32, i32, i32) {
    %c0_i32 = arith.constant 0 : i32
    %c0_i32_0 = arith.constant 0 : i32
    %c0_i32_1 = arith.constant 0 : i32
    return %arg0, %c0_i32, %c0_i32_0 : i32, i32, i32
  }
  func.func @transform_1(%arg0: i32, %arg1: i32) -> (i32, i32, i32) {
    %c0_i32 = arith.constant 0 : i32
    %c0_i32_0 = arith.constant 0 : i32
    %c0_i32_1 = arith.constant 0 : i32
    return %arg0, %c0_i32, %c0_i32_0 : i32, i32, i32
  }
  func.func @transform_2(%arg0: i32, %arg1: i32) -> (i32, i32) {
    %c0_i32 = arith.constant 0 : i32
    %c0_i32_0 = arith.constant 0 : i32
    return %arg0, %c0_i32 : i32, i32
  }
  func.func @transform_3(%arg0: i32, %arg1: i32) -> (i32, i32) {
    %c0_i32 = arith.constant 0 : i32
    %c0_i32_0 = arith.constant 0 : i32
    %c0_i32_1 = arith.constant 0 : i32
    return %c0_i32, %c0_i32_0 : i32, i32
  }
  func.func @transform_4(%arg0: i32, %arg1: i32) -> (i32, i32) {
    %c0_i32 = arith.constant 0 : i32
    %c0_i32_0 = arith.constant 0 : i32
    %c0_i32_1 = arith.constant 0 : i32
    return %c0_i32, %c0_i32_0 : i32, i32
  }
  func.func @transform_5(%arg0: i32, %arg1: i32) -> (i32, i32) {
    %c0_i32 = arith.constant 0 : i32
    %c0_i32_0 = arith.constant 0 : i32
    %c0_i32_1 = arith.constant 0 : i32
    return %c0_i32, %c0_i32_0 : i32, i32
  }
  func.func @transform_6(%arg0: i32, %arg1: i32) -> (i32, i32) {
    %c0_i32 = arith.constant 0 : i32
    %c0_i32_0 = arith.constant 0 : i32
    %c0_i32_1 = arith.constant 0 : i32
    return %c0_i32, %c0_i32_0 : i32, i32
  }
  func.func @transform_7(%arg0: i32, %arg1: i32) -> (i32, i32) {
    %c0_i32 = arith.constant 0 : i32
    %c0_i32_0 = arith.constant 0 : i32
    %c0_i32_1 = arith.constant 0 : i32
    return %c0_i32, %c0_i32_0 : i32, i32
  }
  func.func @transform_8(%arg0: i32, %arg1: i32) -> (i32, i32) {
    %c0_i32 = arith.constant 0 : i32
    %c0_i32_0 = arith.constant 0 : i32
    %c0_i32_1 = arith.constant 0 : i32
    return %c0_i32, %c0_i32_0 : i32, i32
  }
  func.func @transform_9(%arg0: i32, %arg1: i32) -> (i32, i32) {
    %c0_i32 = arith.constant 0 : i32
    %c0_i32_0 = arith.constant 0 : i32
    %c0_i32_1 = arith.constant 0 : i32
    return %c0_i32, %c0_i32_0 : i32, i32
  }
  func.func @transform_10(%arg0: i32, %arg1: i32) -> (i32, i32) {
    %c0_i32 = arith.constant 0 : i32
    %c0_i32_0 = arith.constant 0 : i32
    %c0_i32_1 = arith.constant 0 : i32
    return %c0_i32, %c0_i32_0 : i32, i32
  }
  func.func @transform_11(%arg0: i32, %arg1: i32) -> (i32, i32) {
    %c0_i32 = arith.constant 0 : i32
    %c0_i32_0 = arith.constant 0 : i32
    return %arg0, %c0_i32 : i32, i32
  }
}

</mosaic_0001>

<llo_original>
// kernel: tpu_custom_call.1
$region0: #{tpu_custom_call.1}
  #allocation0 [shape = 'u32[]', space=smem, size = 0x4, offset = 0x4, fixed_abs, tag = 'smem constant byte address 0x4 - core index']
  #allocation1 [shape = 'u32[144,128]{1,0:T(1,128)}', space=vmem, size = 0x12000, scoped, tag = 'internal scratch']
  #allocation2 [shape = 'f32[16,32]{1,0:T(8,128)}', space=vmem, size = 0x2000, scoped, tag = 'scratch operand']
  %s0 = inlined_call_operand.hbm [shape: f32[2,8,8], index: 0, kind: input, shape index: {}]
  %s1 = inlined_call_operand.hbm [shape: f32[2,8,8], index: 1, kind: input, shape index: {}]
  %s2 = inlined_call_operand.hbm [shape: f32[16,32], index: 2, kind: input, shape index: {}]
  %s3 = inlined_call_operand.hbm [shape: f32[32,32], index: 3, kind: input, shape index: {}]
  %s4 = inlined_call_operand.vmem [shape: f32[1,32], index: 4, kind: input, shape index: {}]
  %s5 = inlined_call_operand.hbm [shape: f32[32,32], index: 5, kind: input, shape index: {}]
  %s6 = inlined_call_operand.vmem [shape: f32[1,32], index: 6, kind: input, shape index: {}]
  %s7 = inlined_call_operand.hbm [shape: f32[32,128], index: 7, kind: input, shape index: {}]
  %s8 = inlined_call_operand.hbm [shape: f32[32,128], index: 8, kind: input, shape index: {}]
  %s9 = inlined_call_operand.hbm [shape: f32[32,128], index: 9, kind: input, shape index: {}]
  %s10 = inlined_call_operand.vmem [shape: f32[1,128], index: 10, kind: input, shape index: {}]
  %s11 = inlined_call_operand.hbm [shape: f32[16,32], index: 11, kind: output, shape index: {}]
  %s12 = sld [smem:[#allocation0]]
  $region94: #{tpu_custom_call.1} parent=0
    _
  %s14 = ssub.s32 1, %s12
  %s15 = scalar_select 0, %s14, %s12
  $region1: #{tpu_custom_call.1} parent=0
    #allocation3 [shape = 'u8[8192]{0}', space=vmem, size = 0x2000, scoped, tag = 'input window, operand 0, single buffered']
    #allocation4 [shape = 's32[1]{0}', space=sflag, size = 0x4, scoped, tag = 'scoped memory for tpu_custom_call.1']
    #allocation5 [shape = 's32[1]{0}', space=sflag, size = 0x4, scoped, tag = 'scoped memory for tpu_custom_call.1']
    #allocation6 [shape = 'u8[8192]{0}', space=vmem, size = 0x2000, scoped, tag = 'input window, operand 1, single buffered']
    #allocation7 [shape = 's32[1]{0}', space=sflag, size = 0x4, scoped, tag = 'scoped memory for tpu_custom_call.1']
    #allocation8 [shape = 'u8[8192]{0}', space=vmem, size = 0x2000, scoped, tag = 'input window, operand 2, single buffered']
    #allocation9 [shape = 'u8[16384]{0}', space=vmem, size = 0x4000, scoped, tag = 'input window, operand 3, single buffered']
    #allocation10 [shape = 's32[1]{0}', space=sflag, size = 0x4, scoped, tag = 'scoped memory for tpu_custom_call.1']
    #allocation11 [shape = 'u8[16384]{0}', space=vmem, size = 0x4000, scoped, tag = 'input window, operand 5, single buffered']
    #allocation12 [shape = 'u8[16384]{0}', space=vmem, size = 0x4000, scoped, tag = 'input window, operand 7, single buffered']
    #allocation13 [shape = 's32[1]{0}', space=sflag, size = 0x4, scoped, tag = 'scoped memory for tpu_custom_call.1']
    #allocation14 [shape = 'u8[16384]{0}', space=vmem, size = 0x4000, scoped, tag = 'input window, operand 8, single buffered']
    #allocation15 [shape = 'u8[16384]{0}', space=vmem, size = 0x4000, scoped, tag = 'input window, operand 9, single buffered']
    #allocation16 [shape = 's32[1]{0}', space=sflag, size = 0x4, scoped, tag = 'scoped memory for tpu_custom_call.1']
    #allocation17 [shape = 'u8[8192]{0}', space=vmem, size = 0x2000, scoped, tag = 'output window, operand 0, single buffered']
    %16 = vsyncpa [#allocation4], 0
    %17 = vsyncpa [#allocation7], 0
    %18 = vsyncpa [#allocation10], 0
    %19 = vsyncpa [#allocation13], 0
    %20 = vsyncpa [#allocation16], 0
    %21 = vsyncpa [#allocation5], 0
    // Predicated region
    $region2: #{tpu_custom_call.1} parent=1 // pred_check
      _
    $region3: #{tpu_custom_call.1} parent=1 // pred_check_branch
      %23 = sbr.rel (0) target = $region5
    $region4: #{tpu_custom_call.1} parent=1 // pred_region
      %s25 = ssub.s32 256, 256
      %26 = vsyncadd [#allocation4], %s25
      %s27 = sshll.u32 [#allocation3], 4
      %s28 = int_to_ptr.vmem [resolvable:$true] %s27
      %33 = dma.hbm_to_vmem [thread:$0]  %s0, 256, %s28, [#allocation4], 128, 128, 8
    $region5: #{tpu_custom_call.1} parent=1 // pred_fallthru
      _
    // Predicated region
    $region6: #{tpu_custom_call.1} parent=1 // pred_check
      _
    $region7: #{tpu_custom_call.1} parent=1 // pred_check_branch
      %35 = sbr.rel (0) target = $region9
    $region8: #{tpu_custom_call.1} parent=1 // pred_region
      %s37 = ssub.s32 256, 256
      %38 = vsyncadd [#allocation7], %s37
      %s39 = sshll.u32 [#allocation6], 4
      %s40 = int_to_ptr.vmem [resolvable:$true] %s39
      %45 = dma.hbm_to_vmem [thread:$0]  %s1, 256, %s40, [#allocation7], 128, 128, 8
    $region9: #{tpu_custom_call.1} parent=1 // pred_fallthru
      _
    // Predicated region
    $region10: #{tpu_custom_call.1} parent=1 // pred_check
      _
    $region11: #{tpu_custom_call.1} parent=1 // pred_check_branch
      %47 = sbr.rel (0) target = $region13
    $region12: #{tpu_custom_call.1} parent=1 // pred_region
      %s49 = ssub.s32 256, 256
      %50 = vsyncadd [#allocation7], %s49
      %s51 = sshll.u32 [#allocation8], 4
      %s52 = int_to_ptr.vmem [resolvable:$true] %s51
      %57 = dma.hbm_to_vmem [thread:$0]  %s2, 256, %s52, [#allocation7], 128, 128, 8
    $region13: #{tpu_custom_call.1} parent=1 // pred_fallthru
      _
    // Predicated region
    $region14: #{tpu_custom_call.1} parent=1 // pred_check
      _
    $region15: #{tpu_custom_call.1} parent=1 // pred_check_branch
      %59 = sbr.rel (0) target = $region17
    $region16: #{tpu_custom_call.1} parent=1 // pred_region
      %s61 = ssub.s32 512, 512
      %62 = vsyncadd [#allocation10], %s61
      %s63 = sshll.u32 [#allocation9], 4
      %s64 = int_to_ptr.vmem [resolvable:$true] %s63
      %69 = dma.hbm_to_vmem [thread:$0]  %s3, 512, %s64, [#allocation10], 128, 128, 8
    $region17: #{tpu_custom_call.1} parent=1 // pred_fallthru
      _
    // Predicated region
    $region18: #{tpu_custom_call.1} parent=1 // pred_check
      _
    $region19: #{tpu_custom_call.1} parent=1 // pred_check_branch
      %71 = sbr.rel (0) target = $region21
    $region20: #{tpu_custom_call.1} parent=1 // pred_region
      _
    $region21: #{tpu_custom_call.1} parent=1 // pred_fallthru
      _
    // Predicated region
    $region22: #{tpu_custom_call.1} parent=1 // pred_check
      _
    $region23: #{tpu_custom_call.1} parent=1 // pred_check_branch
      %73 = sbr.rel (0) target = $region25
    $region24: #{tpu_custom_call.1} parent=1 // pred_region
      %s75 = ssub.s32 512, 512
      %76 = vsyncadd [#allocation10], %s75
      %s77 = sshll.u32 [#allocation11], 4
      %s78 = int_to_ptr.vmem [resolvable:$true] %s77
      %83 = dma.hbm_to_vmem [thread:$0]  %s5, 512, %s78, [#allocation10], 128, 128, 8
    $region25: #{tpu_custom_call.1} parent=1 // pred_fallthru
      _
    // Predicated region
    $region26: #{tpu_custom_call.1} parent=1 // pred_check
      _
    $region27: #{tpu_custom_call.1} parent=1 // pred_check_branch
      %85 = sbr.rel (0) target = $region29
    $region28: #{tpu_custom_call.1} parent=1 // pred_region
      _
    $region29: #{tpu_custom_call.1} parent=1 // pred_fallthru
      _
    // Predicated region
    $region30: #{tpu_custom_call.1} parent=1 // pred_check
      _
    $region31: #{tpu_custom_call.1} parent=1 // pred_check_branch
      %87 = sbr.rel (0) target = $region33
    $region32: #{tpu_custom_call.1} parent=1 // pred_region
      %s89 = ssub.s32 512, 512
      %90 = vsyncadd [#allocation13], %s89
      %s91 = sshll.u32 [#allocation12], 4
      %s92 = int_to_ptr.vmem [resolvable:$true] %s91
      %97 = dma.hbm_to_vmem [thread:$0]  %s7, 512, %s92, [#allocation13], 128, 128, 8
    $region33: #{tpu_custom_call.1} parent=1 // pred_fallthru
      _
    // Predicated region
    $region34: #{tpu_custom_call.1} parent=1 // pred_check
      _
    $region35: #{tpu_custom_call.1} parent=1 // pred_check_branch
      %99 = sbr.rel (0) target = $region37
    $region36: #{tpu_custom_call.1} parent=1 // pred_region
      %s101 = ssub.s32 512, 512
      %102 = vsyncadd [#allocation13], %s101
      %s103 = sshll.u32 [#allocation14], 4
      %s104 = int_to_ptr.vmem [resolvable:$true] %s103
      %109 = dma.hbm_to_vmem [thread:$0]  %s8, 512, %s104, [#allocation13], 128, 128, 8
    $region37: #{tpu_custom_call.1} parent=1 // pred_fallthru
      _
    // Predicated region
    $region38: #{tpu_custom_call.1} parent=1 // pred_check
      _
    $region39: #{tpu_custom_call.1} parent=1 // pred_check_branch
      %111 = sbr.rel (0) target = $region41
    $region40: #{tpu_custom_call.1} parent=1 // pred_region
      %s113 = ssub.s32 512, 512
      %114 = vsyncadd [#allocation16], %s113
      %s115 = sshll.u32 [#allocation15], 4
      %s116 = int_to_ptr.vmem [resolvable:$true] %s115
      %121 = dma.hbm_to_vmem [thread:$0]  %s9, 512, %s116, [#allocation16], 128, 128, 8
    $region41: #{tpu_custom_call.1} parent=1 // pred_fallthru
      _
    // Predicated region
    $region42: #{tpu_custom_call.1} parent=1 // pred_check
      _
    $region43: #{tpu_custom_call.1} parent=1 // pred_check_branch
      %123 = sbr.rel (0) target = $region45
    $region44: #{tpu_custom_call.1} parent=1 // pred_region
      _
    $region45: #{tpu_custom_call.1} parent=1 // pred_fallthru
      _
    // Predicated region
    $region46: #{tpu_custom_call.1} parent=1 // pred_check
      _
    $region47: #{tpu_custom_call.1} parent=1 // pred_check_branch
      %125 = sbr.rel (0) target = $region49
    $region48: #{tpu_custom_call.1} parent=1 // pred_region
      %126 = dma.done [#allocation4], 256
    $region49: #{tpu_custom_call.1} parent=1 // pred_fallthru
      _
    // Predicated region
    $region50: #{tpu_custom_call.1} parent=1 // pred_check
      _
    $region51: #{tpu_custom_call.1} parent=1 // pred_check_branch
      %128 = sbr.rel (0) target = $region53
    $region52: #{tpu_custom_call.1} parent=1 // pred_region
      %129 = dma.done [#allocation7], 256
    $region53: #{tpu_custom_call.1} parent=1 // pred_fallthru
      _
    // Predicated region
    $region54: #{tpu_custom_call.1} parent=1 // pred_check
      _
    $region55: #{tpu_custom_call.1} parent=1 // pred_check_branch
      %131 = sbr.rel (0) target = $region57
    $region56: #{tpu_custom_call.1} parent=1 // pred_region
      %132 = dma.done [#allocation7], 256
    $region57: #{tpu_custom_call.1} parent=1 // pred_fallthru
      _
    // Predicated region
    $region58: #{tpu_custom_call.1} parent=1 // pred_check
      _
    $region59: #{tpu_custom_call.1} parent=1 // pred_check_branch
      %134 = sbr.rel (0) target = $region61
    $region60: #{tpu_custom_call.1} parent=1 // pred_region
      %135 = dma.done [#allocation10], 512
    $region61: #{tpu_custom_call.1} parent=1 // pred_fallthru
      _
    // Predicated region
    $region62: #{tpu_custom_call.1} parent=1 // pred_check
      _
    $region63: #{tpu_custom_call.1} parent=1 // pred_check_branch
      %137 = sbr.rel (0) target = $region65
    $region64: #{tpu_custom_call.1} parent=1 // pred_region
      %138 = dma.done [#allocation10], 512
    $region65: #{tpu_custom_call.1} parent=1 // pred_fallthru
      _
    // Predicated region
    $region66: #{tpu_custom_call.1} parent=1 // pred_check
      _
    $region67: #{tpu_custom_call.1} parent=1 // pred_check_branch
      %140 = sbr.rel (0) target = $region69
    $region68: #{tpu_custom_call.1} parent=1 // pred_region
      %141 = dma.done [#allocation13], 512
    $region69: #{tpu_custom_call.1} parent=1 // pred_fallthru
      _
    // Predicated region
    $region70: #{tpu_custom_call.1} parent=1 // pred_check
      _
    $region71: #{tpu_custom_call.1} parent=1 // pred_check_branch
      %143 = sbr.rel (0) target = $region73
    $region72: #{tpu_custom_call.1} parent=1 // pred_region
      %144 = dma.done [#allocation13], 512
    $region73: #{tpu_custom_call.1} parent=1 // pred_fallthru
      _
    // Predicated region
    $region74: #{tpu_custom_call.1} parent=1 // pred_check
      _
    $region75: #{tpu_custom_call.1} parent=1 // pred_check_branch
      %146 = sbr.rel (0) target = $region77
    $region76: #{tpu_custom_call.1} parent=1 // pred_region
      %147 = dma.done [#allocation16], 512
    $region77: #{tpu_custom_call.1} parent=1 // pred_fallthru
      _
    %p148 = scmp.eq.s32.totalorder 0, 0
    // Predicated region
    $region78: #{tpu_custom_call.1} parent=1 // pred_check
      %p149 = pneg %p148
    $region79: #{tpu_custom_call.1} parent=1 // pred_check_branch
      %151 = sbr.rel (%p149) target = $region81
    $region80: #{tpu_custom_call.1} parent=1 // pred_region
      %v152 = vld [vmem:[#allocation8] sm:$0xff]
      %v153 = vld [vmem:[#allocation8 + $0x8] sm:$0xff]
      %vm154 = vcmask 261120
      %155 = vst.msk [vmem:[#allocation2] sm:$0xff] %vm154, %v152
      %156 = vst.msk [vmem:[#allocation2 + $0x8] sm:$0xff] %vm154, %v153
    $region81: #{tpu_custom_call.1} parent=1 // pred_fallthru
      _
    %v157 = vld [vmem:[#allocation2] sm:$0xff]
    %v158 = vld [vmem:[#allocation2 + $0x8] sm:$0xff]
    %v159 = vld [vmem:[#allocation9] sm:$0xff]
    %v160 = vld [vmem:[#allocation9 + $0x8] sm:$0xff]
    %v161 = vld [vmem:[#allocation9 + $0x10] sm:$0xff]
    %v162 = vld [vmem:[#allocation9 + $0x18] sm:$0xff]
    %v163 = vld [vmem:[%s4] sm:$0x1]
    %v165 = vlaneseq
    %v166 = vshrl.u32 %v165, 7
    %v167 = vsub.s32 0, %v166
    %v168 = vrot.slane %v163, %v167
    %vm170 = vcmask 261120
    %v172 = vsel %vm170, %v157, 0
    %v175 = vsel %vm170, %v158, 0
    %177 = vmatprep.subr.mxu0 0.0
    %178 = vmatpush1.msra.mxu0 0.0
    %179 = vmatprep.subr.mxu0 0.0
    %180 = vmatpush1.msra.mxu0 0.0
    %181 = vmatprep.subr.mxu0 0.0
    %182 = vmatpush1.msra.mxu0 0.0
    %183 = vmatprep.subr.mxu0 0.0
    %184 = vmatpush1.msra.mxu0 0.0
    %185 = vmatprep.subr.mxu0 0.0
    %186 = vmatpush1.msra.mxu0 0.0
    %187 = vmatprep.subr.mxu0 0.0
    %188 = vmatpush1.msra.mxu0 0.0
    %189 = vmatprep.subr.mxu0 0.0
    %190 = vmatpush1.msra.mxu0 0.0
    %191 = vmatprep.subr.mxu0 0.0
    %192 = vmatpush1.msra.mxu0 0.0
    %193 = vmatprep.subr.mxu0 0.0
    %194 = vmatpush1.msra.mxu0 0.0
    %195 = vmatprep.subr.mxu0 0.0
    %196 = vmatpush1.msra.mxu0 0.0
    %197 = vmatprep.subr.mxu0 0.0
    %198 = vmatpush1.msra.mxu0 0.0
    %199 = vmatprep.subr.mxu0 0.0
    %200 = vmatpush1.msra.mxu0 0.0
    %201 = vmatprep.subr.mxu0 0.0
    %202 = vmatpush1.msra.mxu0 %v162
    %203 = vmatprep.subr.mxu0 0.0
    %204 = vmatpush1.msra.mxu0 %v161
    %205 = vmatprep.subr.mxu0 0.0
    %206 = vmatpush1.msra.mxu0 %v160
    %207 = vmatprep.subr.mxu0 0.0
    %208 = vmatpush1.msra.mxu0 %v159
    %209 = vmatprep.subr.mxu0 0.0
    %210 = vmatpush2.msra.mxu0 0.0
    %211 = vmatprep.subr.mxu0 0.0
    %212 = vmatpush2.msra.mxu0 0.0
    %213 = vmatprep.subr.mxu0 0.0
    %214 = vmatpush2.msra.mxu0 0.0
    %215 = vmatprep.subr.mxu0 0.0
    %216 = vmatpush2.msra.mxu0 0.0
    %217 = vmatprep.subr.mxu0 0.0
    %218 = vmatpush2.msra.mxu0 0.0
    %219 = vmatprep.subr.mxu0 0.0
    %220 = vmatpush2.msra.mxu0 0.0
    %221 = vmatprep.subr.mxu0 0.0
    %222 = vmatpush2.msra.mxu0 0.0
    %223 = vmatprep.subr.mxu0 0.0
    %224 = vmatpush2.msra.mxu0 0.0
    %225 = vmatprep.subr.mxu0 0.0
    %226 = vmatpush2.msra.mxu0 0.0
    %227 = vmatprep.subr.mxu0 0.0
    %228 = vmatpush2.msra.mxu0 0.0
    %229 = vmatprep.subr.mxu0 0.0
    %230 = vmatpush2.msra.mxu0 0.0
    %231 = vmatprep.subr.mxu0 0.0
    %232 = vmatpush2.msra.mxu0 0.0
    %233 = vmatprep.subr.mxu0 0.0
    %234 = vmatpush2.msra.mxu0 0.0
    %235 = vmatprep.subr.mxu0 0.0
    %236 = vmatpush2.msra.mxu0 0.0
    %237 = vmatprep.subr.mxu0 0.0
    %238 = vmatpush2.msra.mxu0 0.0
    %239 = vmatprep.subr.mxu0 0.0
    %240 = vmatpush2.msra.mxu0 0.0
    %241 = vmatprep.mubr.f32.mxu0 0.0
    %242 = vmatmul.mubr.f32.gmra.mxu0 %v172
    %v243 = vpop.f32.mrf.mxu0
    %v244 = vadd.f32 %v168, %v243
    %v245 = vpop.f32.mrf.mxu0
    %246 = vmatprep.mubr.f32.mxu0 0.0
    %247 = vmatmul.mubr.f32.gmra.mxu0 %v175
    %v248 = vpop.f32.mrf.mxu0
    %v249 = vadd.f32 %v168, %v248
    %v250 = vpop.f32.mrf.mxu0
    %251 = vdwg.mxu0
    %v252 = vld [vmem:[#allocation11] sm:$0xff]
    %v253 = vld [vmem:[#allocation11 + $0x8] sm:$0xff]
    %v254 = vld [vmem:[#allocation11 + $0x10] sm:$0xff]
    %v255 = vld [vmem:[#allocation11 + $0x18] sm:$0xff]
    %v256 = vld [vmem:[%s6] sm:$0x1]
    %v258 = vlaneseq
    %v259 = vshrl.u32 %v258, 7
    %v260 = vsub.s32 0, %v259
    %v261 = vrot.slane %v256, %v260
    %263 = vmatprep.subr.mxu0 0.0
    %264 = vmatpush1.msra.mxu0 0.0
    %265 = vmatprep.subr.mxu0 0.0
    %266 = vmatpush1.msra.mxu0 0.0
    %267 = vmatprep.subr.mxu0 0.0
    %268 = vmatpush1.msra.mxu0 0.0
    %269 = vmatprep.subr.mxu0 0.0
    %270 = vmatpush1.msra.mxu0 0.0
    %271 = vmatprep.subr.mxu0 0.0
    %272 = vmatpush1.msra.mxu0 0.0
    %273 = vmatprep.subr.mxu0 0.0
    %274 = vmatpush1.msra.mxu0 0.0
    %275 = vmatprep.subr.mxu0 0.0
    %276 = vmatpush1.msra.mxu0 0.0
    %277 = vmatprep.subr.mxu0 0.0
    %278 = vmatpush1.msra.mxu0 0.0
    %279 = vmatprep.subr.mxu0 0.0
    %280 = vmatpush1.msra.mxu0 0.0
    %281 = vmatprep.subr.mxu0 0.0
    %282 = vmatpush1.msra.mxu0 0.0
    %283 = vmatprep.subr.mxu0 0.0
    %284 = vmatpush1.msra.mxu0 0.0
    %285 = vmatprep.subr.mxu0 0.0
    %286 = vmatpush1.msra.mxu0 0.0
    %287 = vmatprep.subr.mxu0 0.0
    %288 = vmatpush1.msra.mxu0 %v255
    %289 = vmatprep.subr.mxu0 0.0
    %290 = vmatpush1.msra.mxu0 %v254
    %291 = vmatprep.subr.mxu0 0.0
    %292 = vmatpush1.msra.mxu0 %v253
    %293 = vmatprep.subr.mxu0 0.0
    %294 = vmatpush1.msra.mxu0 %v252
    %295 = vmatprep.subr.mxu0 0.0
    %296 = vmatpush2.msra.mxu0 0.0
    %297 = vmatprep.subr.mxu0 0.0
    %298 = vmatpush2.msra.mxu0 0.0
    %299 = vmatprep.subr.mxu0 0.0
    %300 = vmatpush2.msra.mxu0 0.0
    %301 = vmatprep.subr.mxu0 0.0
    %302 = vmatpush2.msra.mxu0 0.0
    %303 = vmatprep.subr.mxu0 0.0
    %304 = vmatpush2.msra.mxu0 0.0
    %305 = vmatprep.subr.mxu0 0.0
    %306 = vmatpush2.msra.mxu0 0.0
    %307 = vmatprep.subr.mxu0 0.0
    %308 = vmatpush2.msra.mxu0 0.0
    %309 = vmatprep.subr.mxu0 0.0
    %310 = vmatpush2.msra.mxu0 0.0
    %311 = vmatprep.subr.mxu0 0.0
    %312 = vmatpush2.msra.mxu0 0.0
    %313 = vmatprep.subr.mxu0 0.0
    %314 = vmatpush2.msra.mxu0 0.0
    %315 = vmatprep.subr.mxu0 0.0
    %316 = vmatpush2.msra.mxu0 0.0
    %317 = vmatprep.subr.mxu0 0.0
    %318 = vmatpush2.msra.mxu0 0.0
    %319 = vmatprep.subr.mxu0 0.0
    %320 = vmatpush2.msra.mxu0 0.0
    %321 = vmatprep.subr.mxu0 0.0
    %322 = vmatpush2.msra.mxu0 0.0
    %323 = vmatprep.subr.mxu0 0.0
    %324 = vmatpush2.msra.mxu0 0.0
    %325 = vmatprep.subr.mxu0 0.0
    %326 = vmatpush2.msra.mxu0 0.0
    %327 = vmatprep.mubr.f32.mxu0 0.0
    %328 = vmatmul.mubr.f32.gmra.mxu0 %v172
    %v329 = vpop.f32.mrf.mxu0
    %v330 = vadd.f32 %v261, %v329
    %v331 = vpop.f32.mrf.mxu0
    %332 = vmatprep.mubr.f32.mxu0 0.0
    %333 = vmatmul.mubr.f32.gmra.mxu0 %v175
    %v334 = vpop.f32.mrf.mxu0
    %v335 = vadd.f32 %v261, %v334
    %v336 = vpop.f32.mrf.mxu0
    %337 = vdwg.mxu0
    %v338 = vld [vmem:[#allocation3] sm:$0xff]
    %v339 = vld [vmem:[#allocation3 + $0x8] sm:$0xff]
    %vm340 = vcmask 64512
    %v342 = vsel %vm340, %v338, 0
    %344 = vmatprep.subr.mxu0 0.0
    %345 = vmatpush1.msra.mxu0 0.0
    %346 = vmatprep.subr.mxu0 0.0
    %347 = vmatpush1.msra.mxu0 0.0
    %348 = vmatprep.subr.mxu0 0.0
    %349 = vmatpush1.msra.mxu0 0.0
    %350 = vmatprep.subr.mxu0 0.0
    %351 = vmatpush1.msra.mxu0 0.0
    %352 = vmatprep.subr.mxu0 0.0
    %353 = vmatpush1.msra.mxu0 0.0
    %354 = vmatprep.subr.mxu0 0.0
    %355 = vmatpush1.msra.mxu0 0.0
    %356 = vmatprep.subr.mxu0 0.0
    %357 = vmatpush1.msra.mxu0 0.0
    %358 = vmatprep.subr.mxu0 0.0
    %359 = vmatpush1.msra.mxu0 0.0
    %360 = vmatprep.subr.mxu0 0.0
    %361 = vmatpush1.msra.mxu0 0.0
    %362 = vmatprep.subr.mxu0 0.0
    %363 = vmatpush1.msra.mxu0 0.0
    %364 = vmatprep.subr.mxu0 0.0
    %365 = vmatpush1.msra.mxu0 0.0
    %366 = vmatprep.subr.mxu0 0.0
    %367 = vmatpush1.msra.mxu0 0.0
    %368 = vmatprep.subr.mxu0 0.0
    %369 = vmatpush1.msra.mxu0 0.0
    %370 = vmatprep.subr.mxu0 0.0
    %371 = vmatpush1.msra.mxu0 0.0
    %372 = vmatprep.subr.mxu0 0.0
    %373 = vmatpush1.msra.mxu0 0.0
    %374 = vmatprep.subr.mxu0 0.0
    %375 = vmatpush1.msra.mxu0 %v244
    %376 = vmatprep.subr.mxu0 0.0
    %377 = vmatpush2.msra.mxu0 0.0
    %378 = vmatprep.subr.mxu0 0.0
    %379 = vmatpush2.msra.mxu0 0.0
    %380 = vmatprep.subr.mxu0 0.0
    %381 = vmatpush2.msra.mxu0 0.0
    %382 = vmatprep.subr.mxu0 0.0
    %383 = vmatpush2.msra.mxu0 0.0
    %384 = vmatprep.subr.mxu0 0.0
    %385 = vmatpush2.msra.mxu0 0.0
    %386 = vmatprep.subr.mxu0 0.0
    %387 = vmatpush2.msra.mxu0 0.0
    %388 = vmatprep.subr.mxu0 0.0
    %389 = vmatpush2.msra.mxu0 0.0
    %390 = vmatprep.subr.mxu0 0.0
    %391 = vmatpush2.msra.mxu0 0.0
    %392 = vmatprep.subr.mxu0 0.0
    %393 = vmatpush2.msra.mxu0 0.0
    %394 = vmatprep.subr.mxu0 0.0
    %395 = vmatpush2.msra.mxu0 0.0
    %396 = vmatprep.subr.mxu0 0.0
    %397 = vmatpush2.msra.mxu0 0.0
    %398 = vmatprep.subr.mxu0 0.0
    %399 = vmatpush2.msra.mxu0 0.0
    %400 = vmatprep.subr.mxu0 0.0
    %401 = vmatpush2.msra.mxu0 0.0
    %402 = vmatprep.subr.mxu0 0.0
    %403 = vmatpush2.msra.mxu0 0.0
    %404 = vmatprep.subr.mxu0 0.0
    %405 = vmatpush2.msra.mxu0 0.0
    %406 = vmatprep.subr.mxu0 0.0
    %407 = vmatpush2.msra.mxu0 0.0
    %408 = vmatprep.mubr.f32.mxu0 0.0
    %409 = vmatmul.mubr.f32.gmra.mxu0 %v342
    %v410 = vpop.f32.mrf.mxu0
    %v411 = vadd.f32 0.0, %v410
    %v412 = vpop.f32.mrf.mxu0
    %413 = vdwg.mxu0
    %v415 = vsel %vm340, %v339, 0
    %417 = vmatprep.subr.mxu0 0.0
    %418 = vmatpush1.msra.mxu0 0.0
    %419 = vmatprep.subr.mxu0 0.0
    %420 = vmatpush1.msra.mxu0 0.0
    %421 = vmatprep.subr.mxu0 0.0
    %422 = vmatpush1.msra.mxu0 0.0
    %423 = vmatprep.subr.mxu0 0.0
    %424 = vmatpush1.msra.mxu0 0.0
    %425 = vmatprep.subr.mxu0 0.0
    %426 = vmatpush1.msra.mxu0 0.0
    %427 = vmatprep.subr.mxu0 0.0
    %428 = vmatpush1.msra.mxu0 0.0
    %429 = vmatprep.subr.mxu0 0.0
    %430 = vmatpush1.msra.mxu0 0.0
    %431 = vmatprep.subr.mxu0 0.0
    %432 = vmatpush1.msra.mxu0 0.0
    %433 = vmatprep.subr.mxu0 0.0
    %434 = vmatpush1.msra.mxu0 0.0
    %435 = vmatprep.subr.mxu0 0.0
    %436 = vmatpush1.msra.mxu0 0.0
    %437 = vmatprep.subr.mxu0 0.0
    %438 = vmatpush1.msra.mxu0 0.0
    %439 = vmatprep.subr.mxu0 0.0
    %440 = vmatpush1.msra.mxu0 0.0
    %441 = vmatprep.subr.mxu0 0.0
    %442 = vmatpush1.msra.mxu0 0.0
    %443 = vmatprep.subr.mxu0 0.0
    %444 = vmatpush1.msra.mxu0 0.0
    %445 = vmatprep.subr.mxu0 0.0
    %446 = vmatpush1.msra.mxu0 0.0
    %447 = vmatprep.subr.mxu0 0.0
    %448 = vmatpush1.msra.mxu0 %v249
    %449 = vmatprep.subr.mxu0 0.0
    %450 = vmatpush2.msra.mxu0 0.0
    %451 = vmatprep.subr.mxu0 0.0
    %452 = vmatpush2.msra.mxu0 0.0
    %453 = vmatprep.subr.mxu0 0.0
    %454 = vmatpush2.msra.mxu0 0.0
    %455 = vmatprep.subr.mxu0 0.0
    %456 = vmatpush2.msra.mxu0 0.0
    %457 = vmatprep.subr.mxu0 0.0
    %458 = vmatpush2.msra.mxu0 0.0
    %459 = vmatprep.subr.mxu0 0.0
    %460 = vmatpush2.msra.mxu0 0.0
    %461 = vmatprep.subr.mxu0 0.0
    %462 = vmatpush2.msra.mxu0 0.0
    %463 = vmatprep.subr.mxu0 0.0
    %464 = vmatpush2.msra.mxu0 0.0
    %465 = vmatprep.subr.mxu0 0.0
    %466 = vmatpush2.msra.mxu0 0.0
    %467 = vmatprep.subr.mxu0 0.0
    %468 = vmatpush2.msra.mxu0 0.0
    %469 = vmatprep.subr.mxu0 0.0
    %470 = vmatpush2.msra.mxu0 0.0
    %471 = vmatprep.subr.mxu0 0.0
    %472 = vmatpush2.msra.mxu0 0.0
    %473 = vmatprep.subr.mxu0 0.0
    %474 = vmatpush2.msra.mxu0 0.0
    %475 = vmatprep.subr.mxu0 0.0
    %476 = vmatpush2.msra.mxu0 0.0
    %477 = vmatprep.subr.mxu0 0.0
    %478 = vmatpush2.msra.mxu0 0.0
    %479 = vmatprep.subr.mxu0 0.0
    %480 = vmatpush2.msra.mxu0 0.0
    %481 = vmatprep.mubr.f32.mxu0 0.0
    %482 = vmatmul.mubr.f32.gmra.mxu0 %v415
    %v483 = vpop.f32.mrf.mxu0
    %v484 = vadd.f32 0.0, %v483
    %v485 = vpop.f32.mrf.mxu0
    %486 = vdwg.mxu0
    %v487 = vld [vmem:[#allocation6] sm:$0xff]
    %v488 = vld [vmem:[#allocation6 + $0x8] sm:$0xff]
    %v490 = vsel %vm340, %v487, 0
    %492 = vmatprep.subr.mxu0 0.0
    %493 = vmatpush1.msra.mxu0 0.0
    %494 = vmatprep.subr.mxu0 0.0
    %495 = vmatpush1.msra.mxu0 0.0
    %496 = vmatprep.subr.mxu0 0.0
    %497 = vmatpush1.msra.mxu0 0.0
    %498 = vmatprep.subr.mxu0 0.0
    %499 = vmatpush1.msra.mxu0 0.0
    %500 = vmatprep.subr.mxu0 0.0
    %501 = vmatpush1.msra.mxu0 0.0
    %502 = vmatprep.subr.mxu0 0.0
    %503 = vmatpush1.msra.mxu0 0.0
    %504 = vmatprep.subr.mxu0 0.0
    %505 = vmatpush1.msra.mxu0 0.0
    %506 = vmatprep.subr.mxu0 0.0
    %507 = vmatpush1.msra.mxu0 0.0
    %508 = vmatprep.subr.mxu0 0.0
    %509 = vmatpush1.msra.mxu0 0.0
    %510 = vmatprep.subr.mxu0 0.0
    %511 = vmatpush1.msra.mxu0 0.0
    %512 = vmatprep.subr.mxu0 0.0
    %513 = vmatpush1.msra.mxu0 0.0
    %514 = vmatprep.subr.mxu0 0.0
    %515 = vmatpush1.msra.mxu0 0.0
    %516 = vmatprep.subr.mxu0 0.0
    %517 = vmatpush1.msra.mxu0 0.0
    %518 = vmatprep.subr.mxu0 0.0
    %519 = vmatpush1.msra.mxu0 0.0
    %520 = vmatprep.subr.mxu0 0.0
    %521 = vmatpush1.msra.mxu0 0.0
    %522 = vmatprep.subr.mxu0 0.0
    %523 = vmatpush1.msra.mxu0 %v330
    %524 = vmatprep.subr.mxu0 0.0
    %525 = vmatpush2.msra.mxu0 0.0
    %526 = vmatprep.subr.mxu0 0.0
    %527 = vmatpush2.msra.mxu0 0.0
    %528 = vmatprep.subr.mxu0 0.0
    %529 = vmatpush2.msra.mxu0 0.0
    %530 = vmatprep.subr.mxu0 0.0
    %531 = vmatpush2.msra.mxu0 0.0
    %532 = vmatprep.subr.mxu0 0.0
    %533 = vmatpush2.msra.mxu0 0.0
    %534 = vmatprep.subr.mxu0 0.0
    %535 = vmatpush2.msra.mxu0 0.0
    %536 = vmatprep.subr.mxu0 0.0
    %537 = vmatpush2.msra.mxu0 0.0
    %538 = vmatprep.subr.mxu0 0.0
    %539 = vmatpush2.msra.mxu0 0.0
    %540 = vmatprep.subr.mxu0 0.0
    %541 = vmatpush2.msra.mxu0 0.0
    %542 = vmatprep.subr.mxu0 0.0
    %543 = vmatpush2.msra.mxu0 0.0
    %544 = vmatprep.subr.mxu0 0.0
    %545 = vmatpush2.msra.mxu0 0.0
    %546 = vmatprep.subr.mxu0 0.0
    %547 = vmatpush2.msra.mxu0 0.0
    %548 = vmatprep.subr.mxu0 0.0
    %549 = vmatpush2.msra.mxu0 0.0
    %550 = vmatprep.subr.mxu0 0.0
    %551 = vmatpush2.msra.mxu0 0.0
    %552 = vmatprep.subr.mxu0 0.0
    %553 = vmatpush2.msra.mxu0 0.0
    %554 = vmatprep.subr.mxu0 0.0
    %555 = vmatpush2.msra.mxu0 0.0
    %556 = vmatprep.mubr.f32.mxu0 0.0
    %557 = vmatmul.mubr.f32.gmra.mxu0 %v490
    %v558 = vpop.f32.mrf.mxu0
    %v559 = vadd.f32 0.0, %v558
    %v560 = vpop.f32.mrf.mxu0
    %561 = vdwg.mxu0
    %v563 = vsel %vm340, %v488, 0
    %565 = vmatprep.subr.mxu0 0.0
    %566 = vmatpush1.msra.mxu0 0.0
    %567 = vmatprep.subr.mxu0 0.0
    %568 = vmatpush1.msra.mxu0 0.0
    %569 = vmatprep.subr.mxu0 0.0
    %570 = vmatpush1.msra.mxu0 0.0
    %571 = vmatprep.subr.mxu0 0.0
    %572 = vmatpush1.msra.mxu0 0.0
    %573 = vmatprep.subr.mxu0 0.0
    %574 = vmatpush1.msra.mxu0 0.0
    %575 = vmatprep.subr.mxu0 0.0
    %576 = vmatpush1.msra.mxu0 0.0
    %577 = vmatprep.subr.mxu0 0.0
    %578 = vmatpush1.msra.mxu0 0.0
    %579 = vmatprep.subr.mxu0 0.0
    %580 = vmatpush1.msra.mxu0 0.0
    %581 = vmatprep.subr.mxu0 0.0
    %582 = vmatpush1.msra.mxu0 0.0
    %583 = vmatprep.subr.mxu0 0.0
    %584 = vmatpush1.msra.mxu0 0.0
    %585 = vmatprep.subr.mxu0 0.0
    %586 = vmatpush1.msra.mxu0 0.0
    %587 = vmatprep.subr.mxu0 0.0
    %588 = vmatpush1.msra.mxu0 0.0
    %589 = vmatprep.subr.mxu0 0.0
    %590 = vmatpush1.msra.mxu0 0.0
    %591 = vmatprep.subr.mxu0 0.0
    %592 = vmatpush1.msra.mxu0 0.0
    %593 = vmatprep.subr.mxu0 0.0
    %594 = vmatpush1.msra.mxu0 0.0
    %595 = vmatprep.subr.mxu0 0.0
    %596 = vmatpush1.msra.mxu0 %v335
    %597 = vmatprep.subr.mxu0 0.0
    %598 = vmatpush2.msra.mxu0 0.0
    %599 = vmatprep.subr.mxu0 0.0
    %600 = vmatpush2.msra.mxu0 0.0
    %601 = vmatprep.subr.mxu0 0.0
    %602 = vmatpush2.msra.mxu0 0.0
    %603 = vmatprep.subr.mxu0 0.0
    %604 = vmatpush2.msra.mxu0 0.0
    %605 = vmatprep.subr.mxu0 0.0
    %606 = vmatpush2.msra.mxu0 0.0
    %607 = vmatprep.subr.mxu0 0.0
    %608 = vmatpush2.msra.mxu0 0.0
    %609 = vmatprep.subr.mxu0 0.0
    %610 = vmatpush2.msra.mxu0 0.0
    %611 = vmatprep.subr.mxu0 0.0
    %612 = vmatpush2.msra.mxu0 0.0
    %613 = vmatprep.subr.mxu0 0.0
    %614 = vmatpush2.msra.mxu0 0.0
    %615 = vmatprep.subr.mxu0 0.0
    %616 = vmatpush2.msra.mxu0 0.0
    %617 = vmatprep.subr.mxu0 0.0
    %618 = vmatpush2.msra.mxu0 0.0
    %619 = vmatprep.subr.mxu0 0.0
    %620 = vmatpush2.msra.mxu0 0.0
    %621 = vmatprep.subr.mxu0 0.0
    %622 = vmatpush2.msra.mxu0 0.0
    %623 = vmatprep.subr.mxu0 0.0
    %624 = vmatpush2.msra.mxu0 0.0
    %625 = vmatprep.subr.mxu0 0.0
    %626 = vmatpush2.msra.mxu0 0.0
    %627 = vmatprep.subr.mxu0 0.0
    %628 = vmatpush2.msra.mxu0 0.0
    %629 = vmatprep.mubr.f32.mxu0 0.0
    %630 = vmatmul.mubr.f32.gmra.mxu0 %v563
    %v631 = vpop.f32.mrf.mxu0
    %v632 = vadd.f32 0.0, %v631
    %v633 = vpop.f32.mrf.mxu0
    %634 = vdwg.mxu0
    %v635 = vld [vmem:[#allocation12] sm:$0xff]
    %v636 = vld [vmem:[#allocation12 + $0x8] sm:$0xff]
    %v637 = vld [vmem:[#allocation12 + $0x10] sm:$0xff]
    %v638 = vld [vmem:[#allocation12 + $0x18] sm:$0xff]
    %v639 = vld [vmem:[#allocation14] sm:$0xff]
    %v640 = vld [vmem:[#allocation14 + $0x8] sm:$0xff]
    %v641 = vld [vmem:[#allocation14 + $0x10] sm:$0xff]
    %v642 = vld [vmem:[#allocation14 + $0x18] sm:$0xff]
    %v644 = vsel %vm170, %v559, 0
    %v647 = vsel %vm170, %v632, 0
    %649 = vmatprep.subr.mxu0 0.0
    %650 = vmatpush1.msra.mxu0 0.0
    %651 = vmatprep.subr.mxu0 0.0
    %652 = vmatpush1.msra.mxu0 0.0
    %653 = vmatprep.subr.mxu0 0.0
    %654 = vmatpush1.msra.mxu0 0.0
    %655 = vmatprep.subr.mxu0 0.0
    %656 = vmatpush1.msra.mxu0 0.0
    %657 = vmatprep.subr.mxu0 0.0
    %658 = vmatpush1.msra.mxu0 0.0
    %659 = vmatprep.subr.mxu0 0.0
    %660 = vmatpush1.msra.mxu0 0.0
    %661 = vmatprep.subr.mxu0 0.0
    %662 = vmatpush1.msra.mxu0 0.0
    %663 = vmatprep.subr.mxu0 0.0
    %664 = vmatpush1.msra.mxu0 0.0
    %665 = vmatprep.subr.mxu0 0.0
    %666 = vmatpush1.msra.mxu0 0.0
    %667 = vmatprep.subr.mxu0 0.0
    %668 = vmatpush1.msra.mxu0 0.0
    %669 = vmatprep.subr.mxu0 0.0
    %670 = vmatpush1.msra.mxu0 0.0
    %671 = vmatprep.subr.mxu0 0.0
    %672 = vmatpush1.msra.mxu0 0.0
    %673 = vmatprep.subr.mxu0 0.0
    %674 = vmatpush1.msra.mxu0 %v642
    %675 = vmatprep.subr.mxu0 0.0
    %676 = vmatpush1.msra.mxu0 %v641
    %677 = vmatprep.subr.mxu0 0.0
    %678 = vmatpush1.msra.mxu0 %v640
    %679 = vmatprep.subr.mxu0 0.0
    %680 = vmatpush1.msra.mxu0 %v639
    %681 = vmatprep.subr.mxu0 0.0
    %682 = vmatpush2.msra.mxu0 0.0
    %683 = vmatprep.subr.mxu0 0.0
    %684 = vmatpush2.msra.mxu0 0.0
    %685 = vmatprep.subr.mxu0 0.0
    %686 = vmatpush2.msra.mxu0 0.0
    %687 = vmatprep.subr.mxu0 0.0
    %688 = vmatpush2.msra.mxu0 0.0
    %689 = vmatprep.subr.mxu0 0.0
    %690 = vmatpush2.msra.mxu0 0.0
    %691 = vmatprep.subr.mxu0 0.0
    %692 = vmatpush2.msra.mxu0 0.0
    %693 = vmatprep.subr.mxu0 0.0
    %694 = vmatpush2.msra.mxu0 0.0
    %695 = vmatprep.subr.mxu0 0.0
    %696 = vmatpush2.msra.mxu0 0.0
    %697 = vmatprep.subr.mxu0 0.0
    %698 = vmatpush2.msra.mxu0 0.0
    %699 = vmatprep.subr.mxu0 0.0
    %700 = vmatpush2.msra.mxu0 0.0
    %701 = vmatprep.subr.mxu0 0.0
    %702 = vmatpush2.msra.mxu0 0.0
    %703 = vmatprep.subr.mxu0 0.0
    %704 = vmatpush2.msra.mxu0 0.0
    %705 = vmatprep.subr.mxu0 0.0
    %706 = vmatpush2.msra.mxu0 0.0
    %707 = vmatprep.subr.mxu0 0.0
    %708 = vmatpush2.msra.mxu0 0.0
    %709 = vmatprep.subr.mxu0 0.0
    %710 = vmatpush2.msra.mxu0 0.0
    %711 = vmatprep.subr.mxu0 0.0
    %712 = vmatpush2.msra.mxu0 0.0
    %713 = vmatprep.mubr.f32.mxu0 0.0
    %714 = vmatmul.mubr.f32.gmra.mxu0 %v644
    %v715 = vpop.f32.mrf.mxu0
    %v716 = vadd.f32 0.0, %v715
    %v717 = vpop.f32.mrf.mxu0
    %718 = vmatprep.mubr.f32.mxu0 0.0
    %719 = vmatmul.mubr.f32.gmra.mxu0 %v647
    %v720 = vpop.f32.mrf.mxu0
    %v721 = vadd.f32 0.0, %v720
    %v722 = vpop.f32.mrf.mxu0
    %723 = vdwg.mxu0
    %v725 = vsel %vm170, %v411, 0
    %v728 = vsel %vm170, %v484, 0
    %730 = vmatprep.subr.mxu0 0.0
    %731 = vmatpush1.msra.mxu0 0.0
    %732 = vmatprep.subr.mxu0 0.0
    %733 = vmatpush1.msra.mxu0 0.0
    %734 = vmatprep.subr.mxu0 0.0
    %735 = vmatpush1.msra.mxu0 0.0
    %736 = vmatprep.subr.mxu0 0.0
    %737 = vmatpush1.msra.mxu0 0.0
    %738 = vmatprep.subr.mxu0 0.0
    %739 = vmatpush1.msra.mxu0 0.0
    %740 = vmatprep.subr.mxu0 0.0
    %741 = vmatpush1.msra.mxu0 0.0
    %742 = vmatprep.subr.mxu0 0.0
    %743 = vmatpush1.msra.mxu0 0.0
    %744 = vmatprep.subr.mxu0 0.0
    %745 = vmatpush1.msra.mxu0 0.0
    %746 = vmatprep.subr.mxu0 0.0
    %747 = vmatpush1.msra.mxu0 0.0
    %748 = vmatprep.subr.mxu0 0.0
    %749 = vmatpush1.msra.mxu0 0.0
    %750 = vmatprep.subr.mxu0 0.0
    %751 = vmatpush1.msra.mxu0 0.0
    %752 = vmatprep.subr.mxu0 0.0
    %753 = vmatpush1.msra.mxu0 0.0
    %754 = vmatprep.subr.mxu0 0.0
    %755 = vmatpush1.msra.mxu0 %v638
    %756 = vmatprep.subr.mxu0 0.0
    %757 = vmatpush1.msra.mxu0 %v637
    %758 = vmatprep.subr.mxu0 0.0
    %759 = vmatpush1.msra.mxu0 %v636
    %760 = vmatprep.subr.mxu0 0.0
    %761 = vmatpush1.msra.mxu0 %v635
    %762 = vmatprep.subr.mxu0 0.0
    %763 = vmatpush2.msra.mxu0 0.0
    %764 = vmatprep.subr.mxu0 0.0
    %765 = vmatpush2.msra.mxu0 0.0
    %766 = vmatprep.subr.mxu0 0.0
    %767 = vmatpush2.msra.mxu0 0.0
    %768 = vmatprep.subr.mxu0 0.0
    %769 = vmatpush2.msra.mxu0 0.0
    %770 = vmatprep.subr.mxu0 0.0
    %771 = vmatpush2.msra.mxu0 0.0
    %772 = vmatprep.subr.mxu0 0.0
    %773 = vmatpush2.msra.mxu0 0.0
    %774 = vmatprep.subr.mxu0 0.0
    %775 = vmatpush2.msra.mxu0 0.0
    %776 = vmatprep.subr.mxu0 0.0
    %777 = vmatpush2.msra.mxu0 0.0
    %778 = vmatprep.subr.mxu0 0.0
    %779 = vmatpush2.msra.mxu0 0.0
    %780 = vmatprep.subr.mxu0 0.0
    %781 = vmatpush2.msra.mxu0 0.0
    %782 = vmatprep.subr.mxu0 0.0
    %783 = vmatpush2.msra.mxu0 0.0
    %784 = vmatprep.subr.mxu0 0.0
    %785 = vmatpush2.msra.mxu0 0.0
    %786 = vmatprep.subr.mxu0 0.0
    %787 = vmatpush2.msra.mxu0 0.0
    %788 = vmatprep.subr.mxu0 0.0
    %789 = vmatpush2.msra.mxu0 0.0
    %790 = vmatprep.subr.mxu0 0.0
    %791 = vmatpush2.msra.mxu0 0.0
    %792 = vmatprep.subr.mxu0 0.0
    %793 = vmatpush2.msra.mxu0 0.0
    %794 = vmatprep.mubr.f32.mxu0 0.0
    %795 = vmatmul.mubr.f32.gmra.mxu0 %v725
    %v796 = vpop.f32.mrf.mxu0
    %v797 = vadd.f32 %v716, %v796
    %v798 = vpop.f32.mrf.mxu0
    %799 = vmatprep.mubr.f32.mxu0 0.0
    %800 = vmatmul.mubr.f32.gmra.mxu0 %v728
    %v801 = vpop.f32.mrf.mxu0
    %v802 = vadd.f32 %v721, %v801
    %v803 = vpop.f32.mrf.mxu0
    %804 = vdwg.mxu0
    %v805 = vld [vmem:[#allocation15] sm:$0xff]
    %v806 = vld [vmem:[#allocation15 + $0x8] sm:$0xff]
    %v807 = vld [vmem:[#allocation15 + $0x10] sm:$0xff]
    %v808 = vld [vmem:[#allocation15 + $0x18] sm:$0xff]
    %809 = vmatprep.subr.mxu0 0.0
    %810 = vmatpush1.msra.mxu0 0.0
    %811 = vmatprep.subr.mxu0 0.0
    %812 = vmatpush1.msra.mxu0 0.0
    %813 = vmatprep.subr.mxu0 0.0
    %814 = vmatpush1.msra.mxu0 0.0
    %815 = vmatprep.subr.mxu0 0.0
    %816 = vmatpush1.msra.mxu0 0.0
    %817 = vmatprep.subr.mxu0 0.0
    %818 = vmatpush1.msra.mxu0 0.0
    %819 = vmatprep.subr.mxu0 0.0
    %820 = vmatpush1.msra.mxu0 0.0
    %821 = vmatprep.subr.mxu0 0.0
    %822 = vmatpush1.msra.mxu0 0.0
    %823 = vmatprep.subr.mxu0 0.0
    %824 = vmatpush1.msra.mxu0 0.0
    %825 = vmatprep.subr.mxu0 0.0
    %826 = vmatpush1.msra.mxu0 0.0
    %827 = vmatprep.subr.mxu0 0.0
    %828 = vmatpush1.msra.mxu0 0.0
    %829 = vmatprep.subr.mxu0 0.0
    %830 = vmatpush1.msra.mxu0 0.0
    %831 = vmatprep.subr.mxu0 0.0
    %832 = vmatpush1.msra.mxu0 0.0
    %833 = vmatprep.subr.mxu0 0.0
    %834 = vmatpush1.msra.mxu0 %v808
    %835 = vmatprep.subr.mxu0 0.0
    %836 = vmatpush1.msra.mxu0 %v807
    %837 = vmatprep.subr.mxu0 0.0
    %838 = vmatpush1.msra.mxu0 %v806
    %839 = vmatprep.subr.mxu0 0.0
    %840 = vmatpush1.msra.mxu0 %v805
    %841 = vmatprep.subr.mxu0 0.0
    %842 = vmatpush2.msra.mxu0 0.0
    %843 = vmatprep.subr.mxu0 0.0
    %844 = vmatpush2.msra.mxu0 0.0
    %845 = vmatprep.subr.mxu0 0.0
    %846 = vmatpush2.msra.mxu0 0.0
    %847 = vmatprep.subr.mxu0 0.0
    %848 = vmatpush2.msra.mxu0 0.0
    %849 = vmatprep.subr.mxu0 0.0
    %850 = vmatpush2.msra.mxu0 0.0
    %851 = vmatprep.subr.mxu0 0.0
    %852 = vmatpush2.msra.mxu0 0.0
    %853 = vmatprep.subr.mxu0 0.0
    %854 = vmatpush2.msra.mxu0 0.0
    %855 = vmatprep.subr.mxu0 0.0
    %856 = vmatpush2.msra.mxu0 0.0
    %857 = vmatprep.subr.mxu0 0.0
    %858 = vmatpush2.msra.mxu0 0.0
    %859 = vmatprep.subr.mxu0 0.0
    %860 = vmatpush2.msra.mxu0 0.0
    %861 = vmatprep.subr.mxu0 0.0
    %862 = vmatpush2.msra.mxu0 0.0
    %863 = vmatprep.subr.mxu0 0.0
    %864 = vmatpush2.msra.mxu0 0.0
    %865 = vmatprep.subr.mxu0 0.0
    %866 = vmatpush2.msra.mxu0 0.0
    %867 = vmatprep.subr.mxu0 0.0
    %868 = vmatpush2.msra.mxu0 0.0
    %869 = vmatprep.subr.mxu0 0.0
    %870 = vmatpush2.msra.mxu0 0.0
    %871 = vmatprep.subr.mxu0 0.0
    %872 = vmatpush2.msra.mxu0 0.0
    %873 = vmatprep.mubr.f32.mxu0 0.0
    %874 = vmatmul.mubr.f32.gmra.mxu0 %v172
    %v875 = vpop.f32.mrf.mxu0
    %v876 = vadd.f32 0.0, %v875
    %v877 = vpop.f32.mrf.mxu0
    %878 = vmatprep.mubr.f32.mxu0 0.0
    %879 = vmatmul.mubr.f32.gmra.mxu0 %v175
    %v880 = vpop.f32.mrf.mxu0
    %v881 = vadd.f32 0.0, %v880
    %v882 = vpop.f32.mrf.mxu0
    %883 = vdwg.mxu0
    %v884 = vadd.f32 %v797, %v876
    %v885 = vadd.f32 %v802, %v881
    %v886 = vld [vmem:[%s10] sm:$0x1]
    %v888 = vlaneseq
    %v889 = vshrl.u32 %v888, 7
    %v890 = vsub.s32 0, %v889
    %v891 = vrot.slane %v886, %v890
    %v893 = vadd.f32 %v884, %v891
    %v894 = vadd.f32 %v885, %v891
    %v895 = vxor.u32 %v893, 2147483648
    %v896 = vxor.u32 %v894, 2147483648
    %v897 = vmul.f32 %v895, 1.442695
    %v898 = vpow.pop %v897
    %v899 = vmul.f32 %v896, 1.442695
    %v900 = vpow.pop %v899
    %v901 = vadd.f32 %v898, 1.0
    %v902 = vadd.f32 %v900, 1.0
    %v903 = vrcp.pop %v901
    %v904 = vmul.f32 1.0, %v903
    %v905 = vrcp.pop %v902
    %v906 = vmul.f32 1.0, %v905
    %909 = vrot.lane.b32.xlu0 %v893, 32
    %v910 = vpop.permute.xlu0 %909
    %911 = vrot.lane.b32.xlu0 %v894, 32
    %v912 = vpop.permute.xlu0 %911
    %v915 = vmul.f32 %v904, %v910
    %v916 = vmul.f32 %v906, %v912
    %919 = vrot.lane.b32.xlu0 %v915, 64
    %v920 = vpop.permute.xlu0 %919
    %921 = vrot.lane.b32.xlu0 %v916, 64
    %v922 = vpop.permute.xlu0 %921
    %v925 = vadd.f32 %v893, %v920
    %v926 = vadd.f32 %v894, %v922
    %v927 = vtanh.pop %v925
    %v928 = vtanh.pop %v926
    %931 = vrot.lane.b32.xlu0 %v927, 64
    %v932 = vpop.permute.xlu0 %931
    %933 = vrot.lane.b32.xlu0 %v928, 64
    %v934 = vpop.permute.xlu0 %933
    %v937 = vsub.f32 %v157, %v932
    %v938 = vsub.f32 %v158, %v934
    %941 = vrot.lane.b32.xlu0 %v937, 32
    %v942 = vpop.permute.xlu0 %941
    %943 = vrot.lane.b32.xlu0 %v938, 32
    %v944 = vpop.permute.xlu0 %943
    %v947 = vmul.f32 %v904, %v942
    %v948 = vmul.f32 %v906, %v944
    %951 = vrot.lane.b32.xlu0 %v947, 32
    %v952 = vpop.permute.xlu0 %951
    %953 = vrot.lane.b32.xlu0 %v948, 32
    %v954 = vpop.permute.xlu0 %953
    %v957 = vadd.f32 %v927, %v952
    %v958 = vadd.f32 %v928, %v954
    %961 = vrot.lane.b32.xlu0 %v957, 64
    %v962 = vpop.permute.xlu0 %961
    %963 = vrot.lane.b32.xlu0 %v958, 64
    %v964 = vpop.permute.xlu0 %963
    %967 = vst.msk [vmem:[#allocation2] sm:$0xff] %vm170, %v962
    %968 = vst.msk [vmem:[#allocation2 + $0x8] sm:$0xff] %vm170, %v964
    // Predicated region
    $region82: #{tpu_custom_call.1} parent=1 // pred_check
      %p969 = pneg %p148
    $region83: #{tpu_custom_call.1} parent=1 // pred_check_branch
      %971 = sbr.rel (%p969) target = $region85
    $region84: #{tpu_custom_call.1} parent=1 // pred_region
      %972 = vst.msk [vmem:[#allocation17] sm:$0xff] %vm170, %v962
      %973 = vst.msk [vmem:[#allocation17 + $0x8] sm:$0xff] %vm170, %v964
    $region85: #{tpu_custom_call.1} parent=1 // pred_fallthru
      _
    // Predicated region
    $region86: #{tpu_custom_call.1} parent=1 // pred_check
      _
    $region87: #{tpu_custom_call.1} parent=1 // pred_check_branch
      %975 = sbr.rel (0) target = $region89
    $region88: #{tpu_custom_call.1} parent=1 // pred_region
      %s977 = ssub.s32 256, 256
      %978 = vsyncadd [#allocation5], %s977
      %s979 = sshll.u32 [#allocation17], 4
      %s980 = int_to_ptr.vmem [resolvable:$true] %s979
      %985 = dma.vmem_to_hbm [thread:$0]  %s980, 256, %s11, [#allocation5], 128, 128, 8
    $region89: #{tpu_custom_call.1} parent=1 // pred_fallthru
      _
    // Predicated region
    $region90: #{tpu_custom_call.1} parent=1 // pred_check
      _
    $region91: #{tpu_custom_call.1} parent=1 // pred_check_branch
      %987 = sbr.rel (0) target = $region93
    $region92: #{tpu_custom_call.1} parent=1 // pred_region
      %988 = dma.done [#allocation5], 256
    $region93: #{tpu_custom_call.1} parent=1 // pred_fallthru
      _
    %989 = vsyncpa [#allocation4], 1
    %990 = vsyncpa [#allocation7], 1
    %991 = vsyncpa [#allocation10], 1
    %992 = vsyncpa [#allocation13], 1
    %993 = vsyncpa [#allocation16], 1
    %994 = vsyncpa [#allocation5], 1

</llo_original>
